<compile_context>
chip_gen: v5e
topology: v5e:2x2
jax: 0.10.0
libtpu: 0.0.40
codegen_flags: <defaults>
</compile_context>

<pallas_src>
import functools

import jax
import jax.numpy as jnp
from jax.experimental import pallas as pl
from jax.experimental.pallas import tpu as pltpu


def rmsnorm_kernel(x_ref, w_ref, o_ref, *, eps: float, inv_dim: float):
    # x_ref: (rows_tile, dim)   w_ref: (1, dim)   o_ref: (rows_tile, dim)
    x = x_ref[...].astype(jnp.float32)
    # sum of squares over the lane axis; fold 1/dim into the rsqrt argument
    ss = jnp.sum(x * x, axis=-1, keepdims=True)
    inv = jax.lax.rsqrt(ss * inv_dim + eps)            # EUP rsqrt
    w = w_ref[...].astype(jnp.float32)                 # (1, dim) broadcasts over rows
    o_ref[...] = (w * (x * inv)).astype(o_ref.dtype)


def _sublane_pack(dtype) -> int:
    # f32 -> 8, bf16 -> 16, int8/fp8 -> 32 rows per packed sublane group
    itemsize = jnp.dtype(dtype).itemsize
    return max(8, 32 // max(itemsize, 1))


def _vmem_capacity_bytes() -> int:
    try:
        return int(pltpu.get_tpu_info().vmem_capacity_bytes)
    except Exception:
        return 64 << 20  # conservative (v7x per-TC VMEM)


def _pick_rows_tile(n_rows: int, dim: int, in_dtype, out_dtype, vmem_cap: int) -> int:
    pack = _sublane_pack(in_dtype)
    in_item = jnp.dtype(in_dtype).itemsize
    out_item = jnp.dtype(out_dtype).itemsize

    # Per-row footprint of the pipeline: double-buffered input + output tiles
    # (native dtypes) plus f32 upcast intermediates.
    per_row_pipeline = dim * (2 * in_item + 2 * out_item + 2 * 4)
    # VMEM budget: ~half of physical VMEM minus headroom for compiler scratch.
    budget = max(vmem_cap // 2 - (8 << 20), 4 << 20)
    rows_by_vmem = budget // per_row_pipeline

    # Target ~8 MiB of combined (single-buffer) in+out tile bytes per grid
    # step so the fixed ~0.35 us per-step overhead is well amortized even at
    # small dim.
    per_row_io = dim * (in_item + out_item)
    rows_by_target = max(pack, (8 << 20) // per_row_io)

    rows = max(pack, min(rows_by_vmem, rows_by_target) // pack * pack)

    # Don't over-tile tiny inputs, and guarantee >= 2 grid steps whenever the
    # input has at least 2*pack rows so the "parallel" row axis can shard
    # across both TensorCores on v7x.
    rows_needed = pl.cdiv(n_rows, pack) * pack
    if rows_needed >= 2 * pack:
        rows = min(rows, max(pack, (rows_needed // 2) // pack * pack))
    else:
        rows = min(rows, rows_needed)
    return max(pack, rows)


@functools.partial(jax.jit, static_argnames=("eps",))
def rmsnorm(x: jax.Array, weight: jax.Array, eps: float = 1e-6) -> jax.Array:
    """RMSnorm over the last axis of x. x: [..., dim], weight: [dim]."""
    orig_shape = x.shape
    dim = orig_shape[-1]
    out_dtype = jnp.promote_types(x.dtype, weight.dtype)  # match torch promotion

    x2d = x.reshape(-1, dim)
    n_rows = x2d.shape[0]
    in_item = jnp.dtype(x.dtype).itemsize
    out_item = jnp.dtype(out_dtype).itemsize

    vmem_cap = _vmem_capacity_bytes()
    rows_tile = _pick_rows_tile(n_rows, dim, x.dtype, out_dtype, vmem_cap)

    # Ragged last block handled by Pallas boundary masking -- no wrapper pad.
    grid_rows = pl.cdiv(n_rows, rows_tile)

    w2d = weight.reshape(1, dim)

    # Explicit scoped-VMEM budget: double-buffered in/out tiles + f32 temps
    # + weight, with headroom; never ask for more than physical VMEM.
    need = (rows_tile * dim * (2 * in_item + 2 * out_item + 2 * 4)
            + dim * 4 * 4 + (16 << 20))
    vmem_limit = int(min(vmem_cap, max(need, 32 << 20)))

    cost = pl.CostEstimate(
        flops=3 * n_rows * dim,
        transcendentals=n_rows,
        bytes_accessed=n_rows * dim * (in_item + out_item)
        + dim * jnp.dtype(weight.dtype).itemsize,
    )

    kernel = functools.partial(rmsnorm_kernel, eps=eps, inv_dim=1.0 / dim)

    out = pl.pallas_call(
        kernel,
        out_shape=jax.ShapeDtypeStruct((n_rows, dim), out_dtype),
        grid_spec=pltpu.PrefetchScalarGridSpec(
            num_scalar_prefetch=0,
            grid=(grid_rows,),
            in_specs=[
                pl.BlockSpec((rows_tile, dim), lambda i: (i, 0)),
                # weight block is constant across the grid -> stays resident
                pl.BlockSpec((1, dim), lambda i: (0, 0)),
            ],
            out_specs=pl.BlockSpec((rows_tile, dim), lambda i: (i, 0)),
        ),
        compiler_params=pltpu.CompilerParams(
            dimension_semantics=("parallel",),
            vmem_limit_bytes=vmem_limit,
        ),
        cost_estimate=cost,
    )(x2d, w2d)

    return out.reshape(orig_shape[:-1] + (dim,))


def _reference(x, weight, eps):
    xf = x.astype(jnp.float32)
    inv = jax.lax.rsqrt(jnp.mean(xf * xf, axis=-1, keepdims=True) + eps)
    return (weight.astype(jnp.float32) * (xf * inv)).astype(
        jnp.promote_types(x.dtype, weight.dtype))


if __name__ == "__main__":
    key = jax.random.PRNGKey(0)
    eps = 1e-6

    # Small, lane-dense shape implied by the module: [batch, seq, dim]
    batch, seq, dim = 2, 8, 128
    x = jax.random.normal(key, (batch, seq, dim), dtype=jnp.float32)
    weight = jnp.ones((dim,), dtype=jnp.float32)   # nn.Parameter(torch.ones(dim))

    y = rmsnorm(x, weight, eps)
    jax.block_until_ready(y)
    ref = _reference(x, weight, eps)
    assert jnp.allclose(y, ref, atol=1e-5, rtol=1e-5), "mismatch vs reference"

    # Second check: row count that doesn't divide the tile -> exercises the
    # ragged last block (masked writes, no cross-row contamination).
    x2 = jax.random.normal(jax.random.PRNGKey(1), (3, 7, dim), dtype=jnp.float32)
    y2 = rmsnorm(x2, weight, eps)
    jax.block_until_ready(y2)
    ref2 = _reference(x2, weight, eps)
    assert jnp.allclose(y2, ref2, atol=1e-5, rtol=1e-5), "mismatch vs reference (ragged)"

    # Third check: mixed dtypes (bf16 activations, f32 weight -> f32 out).
    x3 = jax.random.normal(jax.random.PRNGKey(2), (4, 5, dim), dtype=jnp.bfloat16)
    y3 = rmsnorm(x3, weight, eps)
    jax.block_until_ready(y3)
    ref3 = _reference(x3, weight, eps)
    assert y3.dtype == ref3.dtype
    assert jnp.allclose(y3.astype(jnp.float32), ref3.astype(jnp.float32),
                        atol=2e-2, rtol=2e-2), "mismatch vs reference (bf16)"

    print("KERNEL_OK")
</pallas_src>

<mosaic_0001>
module attributes {stable_mosaic.version = 11 : i64} {
  func.func @rmsnorm_kernel(%arg0: i32, %arg1: memref<8x128xf32, #tpu.memory_space<vmem>>, %arg2: memref<1x128xf32, #tpu.memory_space<vmem>>, %arg3: memref<8x128xf32, #tpu.memory_space<vmem>>) attributes {dimension_semantics = [#tpu.dimension_semantics<parallel>], iteration_bounds = array<i64: 2>, scalar_prefetch = 0 : i64, scratch_operands = 0 : i64, tpu.core_type = #tpu.core_type<tc>, window_params = [{transform_indices = @transform_0, window_bounds = array<i64: 8, 128>}, {pipeline_mode = #tpu.pipeline_mode<synchronous>, transform_indices = @transform_1, window_bounds = array<i64: 1, 128>}, {transform_indices = @transform_2, window_bounds = array<i64: 8, 128>}]} {
    %c0 = arith.constant 0 : index
    %c0_0 = arith.constant 0 : index
    %0 = vector.load %arg1[%c0, %c0_0] : memref<8x128xf32, #tpu.memory_space<vmem>>, vector<8x128xf32>
    %1 = arith.mulf %0, %0 : vector<8x128xf32>
    %cst = arith.constant dense<0.000000e+00> : vector<8xf32>
    %2 = vector.multi_reduction <add>, %1, %cst [1] : vector<8x128xf32> to vector<8xf32>
    %3 = vector.shape_cast %2 : vector<8xf32> to vector<8x1xf32>
    %cst_1 = arith.constant 7.812500e-03 : f32
    %4 = vector.broadcast %cst_1 : f32 to vector<8x1xf32>
    %5 = arith.mulf %3, %4 : vector<8x1xf32>
    %cst_2 = arith.constant 9.99999997E-7 : f32
    %6 = vector.broadcast %cst_2 : f32 to vector<8x1xf32>
    %7 = arith.addf %5, %6 : vector<8x1xf32>
    %8 = math.rsqrt %7 : vector<8x1xf32>
    %c0_3 = arith.constant 0 : index
    %c0_4 = arith.constant 0 : index
    %9 = vector.load %arg2[%c0_3, %c0_4] : memref<1x128xf32, #tpu.memory_space<vmem>>, vector<1x128xf32>
    %10 = vector.broadcast %8 : vector<8x1xf32> to vector<8x128xf32>
    %11 = arith.mulf %0, %10 : vector<8x128xf32>
    %12 = vector.broadcast %9 : vector<1x128xf32> to vector<8x128xf32>
    %13 = arith.mulf %12, %11 : vector<8x128xf32>
    %c0_5 = arith.constant 0 : index
    %c0_6 = arith.constant 0 : index
    %14 = vector.load %arg3[%c0_5, %c0_6] : memref<8x128xf32, #tpu.memory_space<vmem>>, vector<8x128xf32>
    tpu.vector_store %arg3[%c0_5, %c0_6], %13 {strides = array<i32>} : memref<8x128xf32, #tpu.memory_space<vmem>>, vector<8x128xf32>,
    return
  }
  func.func @transform_0(%arg0: i32) -> (i32, i32) {
    %c0_i32 = arith.constant 0 : i32
    %c0_i32_0 = arith.constant 0 : i32
    return %arg0, %c0_i32 : i32, i32
  }
  func.func @transform_1(%arg0: i32) -> (i32, i32) {
    %c0_i32 = arith.constant 0 : i32
    %c0_i32_0 = arith.constant 0 : i32
    %c0_i32_1 = arith.constant 0 : i32
    return %c0_i32, %c0_i32_0 : i32, i32
  }
  func.func @transform_2(%arg0: i32) -> (i32, i32) {
    %c0_i32 = arith.constant 0 : i32
    %c0_i32_0 = arith.constant 0 : i32
    return %arg0, %c0_i32 : i32, i32
  }
}

</mosaic_0001>

<llo_original>
// kernel: rmsnorm.1
$region0: #{rmsnorm.1}
  #allocation0 [shape = 'u32[]', space=smem, size = 0x4, offset = 0x4, fixed_abs, tag = 'smem constant byte address 0x4 - core index']
  #allocation1 [shape = 'u32[72,128]{1,0:T(1,128)}', space=vmem, size = 0x9000, scoped, tag = 'internal scratch']
  %s0 = inlined_call_operand.hbm [shape: f32[16,128], index: 0, kind: input, shape index: {}]
  %s1 = inlined_call_operand.vmem [shape: f32[1,128], index: 1, kind: input, shape index: {}]
  %s2 = inlined_call_operand.hbm [shape: f32[16,128], index: 2, kind: output, shape index: {}]
  %s3 = sld [smem:[#allocation0]]
  $region45: #{rmsnorm.1} parent=0
    _
  %s5 = ssub.s32 1, %s3
  %s6 = scalar_select 0, %s5, %s3
  $region1: #{rmsnorm.1} parent=0
    #allocation2 [shape = 'u8[8192]{0}', space=vmem, size = 0x2000, scoped, tag = 'input window, operand 0']
    #allocation3 [shape = 's32[2]{0}', space=sflag, size = 0x8, scoped, tag = 'scoped memory for rmsnorm.1']
    #allocation4 [shape = 's32[2]{0}', space=sflag, size = 0x8, scoped, tag = 'scoped memory for rmsnorm.1']
    #allocation5 [shape = 'u8[8192]{0}', space=vmem, size = 0x2000, scoped, tag = 'output window, operand 0']
    %7 = vsyncpa [#allocation3], 0
    %s8 = scalar_lea.sflag [#allocation3], 1
    %9 = vsyncpa %s8, 0
    %10 = vsyncpa [#allocation4], 0
    %s11 = scalar_lea.sflag [#allocation4], 1
    %12 = vsyncpa %s11, 0
    loop: start=0, step=1, limit=4
    $region2: #{rmsnorm.1} parent=1 // loop_pre_header
      _
    $region3: #{rmsnorm.1} parent=1 // loop_header
      %s14 = sphi 0, %s18
      %p15 = scmp.ge.s32.totalorder %s14, 4
      %s24 = sphi 0, %s26
      %s27 = sphi 0, %s24
      %s28 = sphi 0, %s27
      %s44 = sphi 0, %s28
      %s48 = sphi 0, %s48
      %s50 = sphi 0, %s48
      %s51 = sphi 0, %s50
      %s65 = sphi 0, %s51
      %s71 = sphi 0, %s73
      %s74 = sphi 0, %s71
      %s75 = sphi 0, %s74
      %s91 = sphi 0, %s75
    $region4: #{rmsnorm.1} parent=1 // loop_header_branch
      %17 = sbr.rel (%p15) target = $region8
    $region5: #{rmsnorm.1} parent=1 // loop_body
      %s19 = ssub.s32 %s14, 1
      %s20 = ssub.s32 %s14, 2
      %s21 = sadd.s32 %s14, 1
      %s22 = ssub.s32 %s14, %s21
      %p23 = scmp.eq.s32.totalorder %s22, 0
      %s25 = sadd.s32 %s24, 1
      %s26 = scalar_select %p23, %s24, %s25
      %p29 = pneg %p23
      %p30 = scmp.eq.s32.totalorder %s14, 1
      %p31 = por %p29, %p30
      %p32 = scmp.ne.s32.totalorder %s24, %s27
      %p33 = scmp.eq.s32.totalorder %s14, 0
      %p34 = por %p32, %p33
      %p35 = scmp.ne.s32.totalorder %s24, %s27
      %p36 = scmp.eq.s32.totalorder %s19, 1
      %p37 = por %p35, %p36
      %p38 = scmp.ne.s32.totalorder %s27, %s28
      %p39 = scmp.eq.s32.totalorder %s19, 0
      %p40 = por %p38, %p39
      %p41 = scmp.ne.s32.totalorder %s27, %s28
      %p42 = scmp.eq.s32.totalorder %s20, 1
      %p43 = por %p41, %p42
      %p45 = scmp.ne.s32.totalorder %s28, %s44
      %p46 = scmp.eq.s32.totalorder %s20, 0
      %p47 = por %p45, %p46
      %s49 = sadd.s32 %s48, 1
      %p52 = scmp.eq.s32.totalorder %s14, 1
      %p53 = scmp.ne.s32.totalorder %s48, %s50
      %p54 = scmp.eq.s32.totalorder %s14, 0
      %p55 = por %p53, %p54
      %p56 = scmp.ne.s32.totalorder %s48, %s50
      %p57 = scmp.eq.s32.totalorder %s19, 1
      %p58 = por %p56, %p57
      %p59 = scmp.ne.s32.totalorder %s50, %s51
      %p60 = scmp.eq.s32.totalorder %s19, 0
      %p61 = por %p59, %p60
      %p62 = scmp.ne.s32.totalorder %s50, %s51
      %p63 = scmp.eq.s32.totalorder %s20, 1
      %p64 = por %p62, %p63
      %p66 = scmp.ne.s32.totalorder %s51, %s65
      %p67 = scmp.eq.s32.totalorder %s20, 0
      %p68 = por %p66, %p67
      %s69 = ssub.s32 %s14, %s21
      %p70 = scmp.eq.s32.totalorder %s69, 0
      %s72 = sadd.s32 %s71, 1
      %s73 = scalar_select %p70, %s71, %s72
      %p76 = pneg %p70
      %p77 = scmp.eq.s32.totalorder %s14, 1
      %p78 = por %p76, %p77
      %p79 = scmp.ne.s32.totalorder %s71, %s74
      %p80 = scmp.eq.s32.totalorder %s14, 0
      %p81 = por %p79, %p80
      %p82 = scmp.ne.s32.totalorder %s71, %s74
      %p83 = scmp.eq.s32.totalorder %s19, 1
      %p84 = por %p82, %p83
      %p85 = scmp.ne.s32.totalorder %s74, %s75
      %p86 = scmp.eq.s32.totalorder %s19, 0
      %p87 = por %p85, %p86
      %p88 = scmp.ne.s32.totalorder %s74, %s75
      %p89 = scmp.eq.s32.totalorder %s20, 1
      %p90 = por %p88, %p89
      %p92 = scmp.ne.s32.totalorder %s75, %s91
      %p93 = scmp.eq.s32.totalorder %s20, 0
      %p94 = por %p92, %p93
      %p95 = scmp.le.s32.totalorder 1, %s14
      %p96 = scmp.lt.s32.totalorder %s14, 3
      %p97 = pnand %p95, %p96
      %p98 = pneg %p97
      // Predicated region
      $region9: #{rmsnorm.1} parent=5 // pred_check
        _
      $region10: #{rmsnorm.1} parent=5 // pred_check_branch
        %100 = sbr.rel (%p97) target = $region12
      $region11: #{rmsnorm.1} parent=5 // pred_region
        %s101 = ssub.s32 %s14, 1
        // Predicated region
        $region13: #{rmsnorm.1} parent=11 // pred_check
          %p102 = pneg %p61
        $region14: #{rmsnorm.1} parent=11 // pred_check_branch
          %104 = sbr.rel (%p102) target = $region16
        $region15: #{rmsnorm.1} parent=11 // pred_region
          _
        $region16: #{rmsnorm.1} parent=11 // pred_fallthru
          _
      $region12: #{rmsnorm.1} parent=5 // pred_fallthru
        _
      %p105 = scmp.lt.s32.totalorder %s14, 2
      // Predicated region
      $region17: #{rmsnorm.1} parent=5 // pred_check
        %p106 = pneg %p105
      $region18: #{rmsnorm.1} parent=5 // pred_check_branch
        %108 = sbr.rel (%p106) target = $region20
      $region19: #{rmsnorm.1} parent=5 // pred_region
        // Predicated region
        $region21: #{rmsnorm.1} parent=19 // pred_check
          %p109 = pneg %p34
        $region22: #{rmsnorm.1} parent=19 // pred_check_branch
          %111 = sbr.rel (%p109) target = $region24
        $region23: #{rmsnorm.1} parent=19 // pred_region
          %s112 = sand.u32 %s24, 1
          %s113 = scalar_lea.sflag [#allocation3], %s112
          %s114 = sand.u32 %s24, 1
          %s115 = smul.addr %s114, 8
          %s116 = scalar_lea.vmem [#allocation2], %s115
          %118 = vsyncadd %s113, 0
          %s119 = smul.addr %s14, 8
          %s120 = scalar_lea.hbm %s0, %s119
          %s122 = sshll.u32 %s120, 4
          %s123 = int_to_ptr.hbm [resolvable:$true] %s122
          %s124 = sshll.u32 %s116, 4
          %s125 = int_to_ptr.vmem [resolvable:$true] %s124
          %127 = dma.hbm_to_vmem [thread:$0]  %s123, 128, %s125, %s113
        $region24: #{rmsnorm.1} parent=19 // pred_fallthru
          _
      $region20: #{rmsnorm.1} parent=5 // pred_fallthru
        _
      %p128 = scmp.le.s32.totalorder 1, %s14
      %p129 = scmp.lt.s32.totalorder %s14, 3
      %p130 = pnand %p128, %p129
      %p131 = pneg %p130
      // Predicated region
      $region25: #{rmsnorm.1} parent=5 // pred_check
        _
      $region26: #{rmsnorm.1} parent=5 // pred_check_branch
        %133 = sbr.rel (%p130) target = $region28
      $region27: #{rmsnorm.1} parent=5 // pred_region
        %s134 = ssub.s32 %s14, 1
        %s135 = sand.u32 %s27, 1
        %s136 = scalar_lea.sflag [#allocation3], %s135
        %s137 = sand.u32 %s27, 1
        %s138 = smul.addr %s137, 8
        %s139 = scalar_lea.vmem [#allocation2], %s138
        // Predicated region
        $region29: #{rmsnorm.1} parent=27 // pred_check
          %p140 = pneg %p40
        $region30: #{rmsnorm.1} parent=27 // pred_check_branch
          %142 = sbr.rel (%p140) target = $region32
        $region31: #{rmsnorm.1} parent=27 // pred_region
          %144 = dma.done %s136, 128
        $region32: #{rmsnorm.1} parent=27 // pred_fallthru
          _
        %s145 = sand.u32 %s27, 1
        %s146 = scalar_lea.sflag [#allocation3], %s145
        %s147 = sand.u32 %s27, 1
        %s148 = smul.addr %s147, 8
        %s149 = scalar_lea.vmem [#allocation2], %s148
        %p150 = pneg %p40
        %p151 = pneg %p37
        %p152 = pneg %p61
        %p153 = pneg %p58
        %p154 = pneg %p87
        %p155 = pneg %p84
        %s156 = sand.u32 %s74, 1
        %s157 = scalar_lea.sflag [#allocation4], %s156
        %s158 = sand.u32 %s74, 1
        %s159 = smul.addr %s158, 8
        %s160 = scalar_lea.vmem [#allocation5], %s159
        %v161 = vld [vmem:[%s139] sm:$0xff]
        %v162 = vmul.f32 %v161, %v161
        %163 = vadd.xlane.f32.xlu0 %v162
        %v164 = vpop.xlane.xlu0 %163
        %v165 = vmul.f32 %v164, 0.0078125
        %v166 = vadd.f32 %v165, 1e-06
        %v167 = vrsqrt.pop %v166
        %v168 = vmul.f32 %v167, %v166
        %v169 = vmul.f32 %v168, %v167
        %v170 = vmul.f32 0.5, %v169
        %v171 = vsub.f32 1.5, %v170
        %v172 = vmul.f32 %v167, %v171
        %vm173 = vweird.f32 %v166
        %vm174 = vweird.f32 %v167
        %vm175 = vmor %vm173, %vm174
        %v176 = vsel %vm175, %v167, %v172
        %v177 = vld [vmem:[%s1] sm:$0x1]
        %v178 = vmul.f32 %v161, %v176
        %v180 = vperm.slane %v177, 0
        %v182 = vmul.f32 %v180, %v178
        %183 = vst [vmem:[%s160] sm:$0xff] %v182
        %s184 = sand.u32 %s74, 1
        %s185 = scalar_lea.sflag [#allocation4], %s184
        %s186 = sand.u32 %s74, 1
        %s187 = smul.addr %s186, 8
        %s188 = scalar_lea.vmem [#allocation5], %s187
        // Predicated region
        $region33: #{rmsnorm.1} parent=27 // pred_check
          %p189 = pneg %p84
        $region34: #{rmsnorm.1} parent=27 // pred_check_branch
          %191 = sbr.rel (%p189) target = $region36
        $region35: #{rmsnorm.1} parent=27 // pred_region
          %193 = vsyncadd %s185, 0
          %s194 = smul.addr %s19, 8
          %s195 = scalar_lea.hbm %s2, %s194
          %s197 = sshll.u32 %s188, 4
          %s198 = int_to_ptr.vmem [resolvable:$true] %s197
          %s199 = sshll.u32 %s195, 4
          %s200 = int_to_ptr.hbm [resolvable:$true] %s199
          %202 = dma.vmem_to_hbm [thread:$0]  %s198, 128, %s200, %s185
        $region36: #{rmsnorm.1} parent=27 // pred_fallthru
          _
      $region28: #{rmsnorm.1} parent=5 // pred_fallthru
        _
      %p203 = scmp.le.s32.totalorder 2, %s14
      // Predicated region
      $region37: #{rmsnorm.1} parent=5 // pred_check
        %p204 = pneg %p203
      $region38: #{rmsnorm.1} parent=5 // pred_check_branch
        %206 = sbr.rel (%p204) target = $region40
      $region39: #{rmsnorm.1} parent=5 // pred_region
        %s207 = ssub.s32 %s14, 2
        // Predicated region
        $region41: #{rmsnorm.1} parent=39 // pred_check
          %p208 = pneg %p90
        $region42: #{rmsnorm.1} parent=39 // pred_check_branch
          %210 = sbr.rel (%p208) target = $region44
        $region43: #{rmsnorm.1} parent=39 // pred_region
          %s211 = sand.u32 %s75, 1
          %s212 = scalar_lea.sflag [#allocation4], %s211
          %s213 = sand.u32 %s75, 1
          %s214 = smul.addr %s213, 8
          %s215 = scalar_lea.vmem [#allocation5], %s214
          %217 = dma.done %s212, 128
        $region44: #{rmsnorm.1} parent=39 // pred_fallthru
          _
      $region40: #{rmsnorm.1} parent=5 // pred_fallthru
        _
    $region6: #{rmsnorm.1} parent=1 // loop_footer
      %s18 = sadd.s32 1, %s14
    $region7: #{rmsnorm.1} parent=1 // loop_footer_branch
      %13 = sbr.rel target = $region3
    $region8: #{rmsnorm.1} parent=1 // loop_exit
      _
    %218 = vsyncpa [#allocation3], 1
    %s219 = scalar_lea.sflag [#allocation3], 1
    %220 = vsyncpa %s219, 1
    %221 = vsyncpa [#allocation4], 1
    %s222 = scalar_lea.sflag [#allocation4], 1
    %223 = vsyncpa %s222, 1

</llo_original>
